<compile_context>
chip_gen: v6e
topology: v6e:2x2x1
jax: 0.10.0
libtpu: 0.0.40
codegen_flags: <defaults>
</compile_context>

<pallas_src>
import functools

import jax
import jax.numpy as jnp
import numpy as np
from jax.experimental import pallas as pl
from jax.experimental.pallas import tpu as pltpu


def _poly_expansion_kernel(xr_ref, xi_ref, or_ref, oi_ref, *, max_degree, feat):
    """Elementwise polynomial-expansion hot path, fully in VMEM.

    xr_ref, xi_ref : (tm, feat)               input tiles
    or_ref, oi_ref : (tm, feat * max_degree)  output tiles (degree-major concat)
    Stores are lane-dense unmasked vst when feat % 128 == 0, masked otherwise.
    """
    out_dtype = or_ref.dtype
    xr = xr_ref[...].astype(jnp.float32)
    xi = xi_ref[...].astype(jnp.float32)

    pr = xr
    pi = xi
    for d in range(1, max_degree + 1):  # statically unrolled, max_degree is small
        if d > 1:
            pr = pr * xr
            pi = pi * xi
        x_pow = pr + pi
        lo = (d - 1) * feat
        or_ref[:, lo:lo + feat] = (x_pow * xr).astype(out_dtype)
        oi_ref[:, lo:lo + feat] = (x_pow * xi).astype(out_dtype)


def _vmem_capacity_bytes():
    try:
        return int(pltpu.get_tpu_info().vmem_capacity_bytes)
    except Exception:
        return 128 * 1024 * 1024  # assume a v5e/v6e-class part if query fails


def _sublane_multiple(itemsize):
    # 8 rows for f32, 16 for bf16/f16, 32 for 8-bit types.
    return max(8, 32 // max(itemsize, 1))


def _bytes_per_row(feat, max_degree, itemsize):
    # Per-row VMEM:
    #   inputs : 2 arrays x 2 pipeline buffers x feat x itemsize
    #   outputs: 2 arrays x 2 pipeline buffers x feat*max_degree x itemsize
    #   in-kernel f32 intermediates: xr, xi, pr, pi, x_pow (~5 x feat)
    #   plus staged per-degree products before the stores (~2 x feat*max_degree)
    return (itemsize * feat * 4
            + itemsize * feat * max_degree * 4
            + 4 * feat * 5
            + 4 * feat * max_degree * 2)


def _choose_tile_rows(m, feat, max_degree, itemsize, sublane, budget, max_rows):
    if m <= sublane:
        return m  # single block; block row dim == full array dim is always legal
    tm = max(1, budget // _bytes_per_row(feat, max_degree, itemsize))
    tm = min(tm, max_rows, m)
    steps = -(-m // tm)
    # Aim for >= 4 grid steps (>= 2 per TensorCore on v7x), else >= 2.
    if steps < 4 and m >= 4 * sublane:
        tm = -(-m // 4)
    elif steps < 2 and m >= 2 * sublane:
        tm = -(-m // 2)
    return max(sublane, (tm // sublane) * sublane)


def polynomial_expansion(x_real, x_imag, max_degree, *, tile_rows=None):
    """Pallas wrapper. x_real/x_imag: (..., F). Returns two (..., F*max_degree)."""
    assert x_real.shape == x_imag.shape
    assert x_real.dtype == x_imag.dtype
    assert max_degree >= 1
    *lead, feat = x_real.shape
    m = int(np.prod(lead)) if lead else 1
    dtype = x_real.dtype
    itemsize = jnp.dtype(dtype).itemsize
    sublane = _sublane_multiple(itemsize)

    vmem_cap = _vmem_capacity_bytes()
    small_vmem = vmem_cap <= 96 * 1024 * 1024       # v7x: 64 MiB per TensorCore
    budget = (16 if small_vmem else 24) * 1024 * 1024
    limit_cap = (32 if small_vmem else 48) * 1024 * 1024
    max_rows = 512 if small_vmem else 1024

    if tile_rows is None:
        tile_rows = _choose_tile_rows(m, feat, max_degree, itemsize, sublane,
                                      budget, max_rows)
    else:
        tile_rows = int(tile_rows)
        tile_rows = m if tile_rows >= m else max(
            sublane, (tile_rows // sublane) * sublane)

    grid0 = pl.cdiv(m, tile_rows)

    xr2 = x_real.reshape(m, feat)
    xi2 = x_imag.reshape(m, feat)

    kernel = functools.partial(
        _poly_expansion_kernel, max_degree=max_degree, feat=feat)

    out_shape = (
        jax.ShapeDtypeStruct((m, feat * max_degree), dtype),
        jax.ShapeDtypeStruct((m, feat * max_degree), dtype),
    )

    in_spec = pl.BlockSpec((tile_rows, feat), lambda i: (i, 0))
    out_spec = pl.BlockSpec((tile_rows, feat * max_degree), lambda i: (i, 0))

    per_step_bytes = tile_rows * _bytes_per_row(feat, max_degree, itemsize)
    vmem_limit = int(min(limit_cap,
                         max(16 * 1024 * 1024,
                             per_step_bytes * 5 // 4 + (2 << 20))))

    # Purely HBM-bound: ~5 flops per element per degree, no transcendentals.
    cost = pl.CostEstimate(
        flops=5 * m * feat * max_degree,
        transcendentals=0,
        bytes_accessed=itemsize * m * feat * 2 * (1 + max_degree),
    )

    out_r, out_i = pl.pallas_call(
        kernel,
        out_shape=out_shape,
        grid_spec=pltpu.PrefetchScalarGridSpec(
            num_scalar_prefetch=0,
            grid=(grid0,),
            in_specs=[in_spec, in_spec],
            out_specs=[out_spec, out_spec],
        ),
        compiler_params=pltpu.CompilerParams(
            dimension_semantics=("parallel",),
            vmem_limit_bytes=vmem_limit,
        ),
        cost_estimate=cost,
    )(xr2, xi2)

    new_shape = tuple(lead) + (feat * max_degree,)
    return out_r.reshape(new_shape), out_i.reshape(new_shape)


def _reference(x_real, x_imag, max_degree):
    outs_r, outs_i = [], []
    for d in range(1, max_degree + 1):
        x_pow = x_real**d + x_imag**d
        outs_r.append(x_pow * x_real)
        outs_i.append(x_pow * x_imag)
    return jnp.concatenate(outs_r, axis=-1), jnp.concatenate(outs_i, axis=-1)


if __name__ == "__main__":
    max_degree = 3
    key = jax.random.PRNGKey(0)
    k1, k2, k3, k4 = jax.random.split(key, 4)

    # Case 1: lane-aligned features; rows split into >= 2 grid steps.
    B, S, F = 2, 8, 128
    x_real = jax.random.normal(k1, (B, S, F), dtype=jnp.float32)
    x_imag = jax.random.normal(k2, (B, S, F), dtype=jnp.float32)
    out_r, out_i = polynomial_expansion(x_real, x_imag, max_degree)
    out_r, out_i = jax.block_until_ready((out_r, out_i))
    ref_r, ref_i = _reference(x_real, x_imag, max_degree)
    np.testing.assert_allclose(np.asarray(out_r), np.asarray(ref_r), rtol=1e-6, atol=1e-6)
    np.testing.assert_allclose(np.asarray(out_i), np.asarray(ref_i), rtol=1e-6, atol=1e-6)
    assert out_r.shape == (B, S, F * max_degree)
    assert out_i.shape == (B, S, F * max_degree)

    # Case 2: ragged rows and non-128-aligned features (masked-store path,
    # ragged final row block — no padding / de-padding HBM passes anymore).
    B2, S2, F2 = 2, 5, 48
    y_real = jax.random.normal(k3, (B2, S2, F2), dtype=jnp.float32)
    y_imag = jax.random.normal(k4, (B2, S2, F2), dtype=jnp.float32)
    yo_r, yo_i = polynomial_expansion(y_real, y_imag, max_degree)
    yo_r, yo_i = jax.block_until_ready((yo_r, yo_i))
    yref_r, yref_i = _reference(y_real, y_imag, max_degree)
    np.testing.assert_allclose(np.asarray(yo_r), np.asarray(yref_r), rtol=1e-6, atol=1e-6)
    np.testing.assert_allclose(np.asarray(yo_i), np.asarray(yref_i), rtol=1e-6, atol=1e-6)
    assert yo_r.shape == (B2, S2, F2 * max_degree)
    assert yo_i.shape == (B2, S2, F2 * max_degree)

    print("KERNEL_OK")
</pallas_src>

<mosaic_0001>
module attributes {stable_mosaic.version = 11 : i64} {
  func.func @_poly_expansion_kernel(%arg0: i32, %arg1: memref<8x128xf32, #tpu.memory_space<vmem>>, %arg2: memref<8x128xf32, #tpu.memory_space<vmem>>, %arg3: memref<8x384xf32, #tpu.memory_space<vmem>>, %arg4: memref<8x384xf32, #tpu.memory_space<vmem>>) attributes {dimension_semantics = [#tpu.dimension_semantics<parallel>], iteration_bounds = array<i64: 2>, scalar_prefetch = 0 : i64, scratch_operands = 0 : i64, tpu.core_type = #tpu.core_type<tc>, window_params = [{transform_indices = @transform_0, window_bounds = array<i64: 8, 128>}, {transform_indices = @transform_1, window_bounds = array<i64: 8, 128>}, {transform_indices = @transform_2, window_bounds = array<i64: 8, 384>}, {transform_indices = @transform_3, window_bounds = array<i64: 8, 384>}]} {
    %c0 = arith.constant 0 : index
    %c0_0 = arith.constant 0 : index
    %0 = vector.load %arg1[%c0, %c0_0] : memref<8x128xf32, #tpu.memory_space<vmem>>, vector<8x128xf32>
    %c0_1 = arith.constant 0 : index
    %c0_2 = arith.constant 0 : index
    %1 = vector.load %arg2[%c0_1, %c0_2] : memref<8x128xf32, #tpu.memory_space<vmem>>, vector<8x128xf32>
    %2 = arith.addf %0, %1 : vector<8x128xf32>
    %3 = arith.mulf %2, %0 : vector<8x128xf32>
    %c0_3 = arith.constant 0 : index
    %c0_4 = arith.constant 0 : index
    %4 = vector.load %arg3[%c0_3, %c0_4] : memref<8x384xf32, #tpu.memory_space<vmem>>, vector<8x128xf32>
    tpu.vector_store %arg3[%c0_3, %c0_4], %3 {strides = array<i32>} : memref<8x384xf32, #tpu.memory_space<vmem>>, vector<8x128xf32>,
    %5 = arith.mulf %2, %1 : vector<8x128xf32>
    %c0_5 = arith.constant 0 : index
    %c0_6 = arith.constant 0 : index
    %6 = vector.load %arg4[%c0_5, %c0_6] : memref<8x384xf32, #tpu.memory_space<vmem>>, vector<8x128xf32>
    tpu.vector_store %arg4[%c0_5, %c0_6], %5 {strides = array<i32>} : memref<8x384xf32, #tpu.memory_space<vmem>>, vector<8x128xf32>,
    %7 = arith.mulf %0, %0 : vector<8x128xf32>
    %8 = arith.mulf %1, %1 : vector<8x128xf32>
    %9 = arith.addf %7, %8 : vector<8x128xf32>
    %10 = arith.mulf %9, %0 : vector<8x128xf32>
    %c0_7 = arith.constant 0 : index
    %c128 = arith.constant 128 : index
    %11 = vector.load %arg3[%c0_7, %c128] : memref<8x384xf32, #tpu.memory_space<vmem>>, vector<8x128xf32>
    tpu.vector_store %arg3[%c0_7, %c128], %10 {strides = array<i32>} : memref<8x384xf32, #tpu.memory_space<vmem>>, vector<8x128xf32>,
    %12 = arith.mulf %9, %1 : vector<8x128xf32>
    %c0_8 = arith.constant 0 : index
    %c128_9 = arith.constant 128 : index
    %13 = vector.load %arg4[%c0_8, %c128_9] : memref<8x384xf32, #tpu.memory_space<vmem>>, vector<8x128xf32>
    tpu.vector_store %arg4[%c0_8, %c128_9], %12 {strides = array<i32>} : memref<8x384xf32, #tpu.memory_space<vmem>>, vector<8x128xf32>,
    %14 = arith.mulf %7, %0 : vector<8x128xf32>
    %15 = arith.mulf %8, %1 : vector<8x128xf32>
    %16 = arith.addf %14, %15 : vector<8x128xf32>
    %17 = arith.mulf %16, %0 : vector<8x128xf32>
    %c0_10 = arith.constant 0 : index
    %c256 = arith.constant 256 : index
    %18 = vector.load %arg3[%c0_10, %c256] : memref<8x384xf32, #tpu.memory_space<vmem>>, vector<8x128xf32>
    tpu.vector_store %arg3[%c0_10, %c256], %17 {strides = array<i32>} : memref<8x384xf32, #tpu.memory_space<vmem>>, vector<8x128xf32>,
    %19 = arith.mulf %16, %1 : vector<8x128xf32>
    %c0_11 = arith.constant 0 : index
    %c256_12 = arith.constant 256 : index
    %20 = vector.load %arg4[%c0_11, %c256_12] : memref<8x384xf32, #tpu.memory_space<vmem>>, vector<8x128xf32>
    tpu.vector_store %arg4[%c0_11, %c256_12], %19 {strides = array<i32>} : memref<8x384xf32, #tpu.memory_space<vmem>>, vector<8x128xf32>,
    return
  }
  func.func @transform_0(%arg0: i32) -> (i32, i32) {
    %c0_i32 = arith.constant 0 : i32
    %c0_i32_0 = arith.constant 0 : i32
    return %arg0, %c0_i32 : i32, i32
  }
  func.func @transform_1(%arg0: i32) -> (i32, i32) {
    %c0_i32 = arith.constant 0 : i32
    %c0_i32_0 = arith.constant 0 : i32
    return %arg0, %c0_i32 : i32, i32
  }
  func.func @transform_2(%arg0: i32) -> (i32, i32) {
    %c0_i32 = arith.constant 0 : i32
    %c0_i32_0 = arith.constant 0 : i32
    return %arg0, %c0_i32 : i32, i32
  }
  func.func @transform_3(%arg0: i32) -> (i32, i32) {
    %c0_i32 = arith.constant 0 : i32
    %c0_i32_0 = arith.constant 0 : i32
    return %arg0, %c0_i32 : i32, i32
  }
}

</mosaic_0001>

<llo_original>
// kernel: tpu_custom_call.1
$region0: #{tpu_custom_call.1}
  #allocation0 [shape = 'u32[]', space=smem, size = 0x4, offset = 0x4, fixed_abs, tag = 'smem constant byte address 0x4 - core index']
  #allocation1 [shape = 'u32[144,128]{1,0:T(1,128)}', space=vmem, size = 0x12000, scoped, tag = 'internal scratch']
  %s0 = inlined_call_operand.hbm [shape: f32[16,128], index: 0, kind: input, shape index: {}]
  %s1 = inlined_call_operand.hbm [shape: f32[16,128], index: 1, kind: input, shape index: {}]
  %s2 = inlined_call_operand.hbm [shape: f32[16,384], index: 2, kind: output, shape index: {0}]
  %s3 = inlined_call_operand.hbm [shape: f32[16,384], index: 3, kind: output, shape index: {1}]
  %4 = xla_tuple %s2, %s3
  %s5 = sld [smem:[#allocation0]]
  $region57: #{tpu_custom_call.1} parent=0
    _
  %s7 = ssub.s32 1, %s5
  %s8 = scalar_select 0, %s7, %s5
  $region1: #{tpu_custom_call.1} parent=0
    #allocation2 [shape = 'u8[8192]{0}', space=vmem, size = 0x2000, scoped, tag = 'input window, operand 0']
    #allocation3 [shape = 's32[2]{0}', space=sflag, size = 0x8, scoped, tag = 'scoped memory for tpu_custom_call.1']
    #allocation4 [shape = 's32[2]{0}', space=sflag, size = 0x8, scoped, tag = 'scoped memory for tpu_custom_call.1']
    #allocation5 [shape = 'u8[8192]{0}', space=vmem, size = 0x2000, scoped, tag = 'input window, operand 1']
    #allocation6 [shape = 's32[2]{0}', space=sflag, size = 0x8, scoped, tag = 'scoped memory for tpu_custom_call.1']
    #allocation7 [shape = 'u8[24576]{0}', space=vmem, size = 0x6000, scoped, tag = 'output window, operand 0']
    #allocation8 [shape = 'u8[24576]{0}', space=vmem, size = 0x6000, scoped, tag = 'output window, operand 1']
    #allocation9 [shape = 's32[2]{0}', space=sflag, size = 0x8, scoped, tag = 'scoped memory for tpu_custom_call.1']
    %9 = vsyncpa [#allocation3], 0
    %s10 = scalar_lea.sflag [#allocation3], 1
    %11 = vsyncpa %s10, 0
    %12 = vsyncpa [#allocation6], 0
    %s13 = scalar_lea.sflag [#allocation6], 1
    %14 = vsyncpa %s13, 0
    %15 = vsyncpa [#allocation4], 0
    %s16 = scalar_lea.sflag [#allocation4], 1
    %17 = vsyncpa %s16, 0
    %18 = vsyncpa [#allocation9], 0
    %s19 = scalar_lea.sflag [#allocation9], 1
    %20 = vsyncpa %s19, 0
    loop: start=0, step=1, limit=4
    $region2: #{tpu_custom_call.1} parent=1 // loop_pre_header
      _
    $region3: #{tpu_custom_call.1} parent=1 // loop_header
      %s22 = sphi 0, %s26
      %p23 = scmp.ge.s32.totalorder %s22, 4
      %s32 = sphi 0, %s34
      %s35 = sphi 0, %s32
      %s36 = sphi 0, %s35
      %s52 = sphi 0, %s36
      %s58 = sphi 0, %s60
      %s61 = sphi 0, %s58
      %s62 = sphi 0, %s61
      %s78 = sphi 0, %s62
      %s84 = sphi 0, %s86
      %s87 = sphi 0, %s84
      %s88 = sphi 0, %s87
      %s104 = sphi 0, %s88
      %s110 = sphi 0, %s112
      %s113 = sphi 0, %s110
      %s114 = sphi 0, %s113
      %s130 = sphi 0, %s114
    $region4: #{tpu_custom_call.1} parent=1 // loop_header_branch
      %25 = sbr.rel (%p23) target = $region8
    $region5: #{tpu_custom_call.1} parent=1 // loop_body
      %s27 = ssub.s32 %s22, 1
      %s28 = ssub.s32 %s22, 2
      %s29 = sadd.s32 %s22, 1
      %s30 = ssub.s32 %s22, %s29
      %p31 = scmp.eq.s32.totalorder %s30, 0
      %s33 = sadd.s32 %s32, 1
      %s34 = scalar_select %p31, %s32, %s33
      %p37 = pneg %p31
      %p38 = scmp.eq.s32.totalorder %s22, 1
      %p39 = por %p37, %p38
      %p40 = scmp.ne.s32.totalorder %s32, %s35
      %p41 = scmp.eq.s32.totalorder %s22, 0
      %p42 = por %p40, %p41
      %p43 = scmp.ne.s32.totalorder %s32, %s35
      %p44 = scmp.eq.s32.totalorder %s27, 1
      %p45 = por %p43, %p44
      %p46 = scmp.ne.s32.totalorder %s35, %s36
      %p47 = scmp.eq.s32.totalorder %s27, 0
      %p48 = por %p46, %p47
      %p49 = scmp.ne.s32.totalorder %s35, %s36
      %p50 = scmp.eq.s32.totalorder %s28, 1
      %p51 = por %p49, %p50
      %p53 = scmp.ne.s32.totalorder %s36, %s52
      %p54 = scmp.eq.s32.totalorder %s28, 0
      %p55 = por %p53, %p54
      %s56 = ssub.s32 %s22, %s29
      %p57 = scmp.eq.s32.totalorder %s56, 0
      %s59 = sadd.s32 %s58, 1
      %s60 = scalar_select %p57, %s58, %s59
      %p63 = pneg %p57
      %p64 = scmp.eq.s32.totalorder %s22, 1
      %p65 = por %p63, %p64
      %p66 = scmp.ne.s32.totalorder %s58, %s61
      %p67 = scmp.eq.s32.totalorder %s22, 0
      %p68 = por %p66, %p67
      %p69 = scmp.ne.s32.totalorder %s58, %s61
      %p70 = scmp.eq.s32.totalorder %s27, 1
      %p71 = por %p69, %p70
      %p72 = scmp.ne.s32.totalorder %s61, %s62
      %p73 = scmp.eq.s32.totalorder %s27, 0
      %p74 = por %p72, %p73
      %p75 = scmp.ne.s32.totalorder %s61, %s62
      %p76 = scmp.eq.s32.totalorder %s28, 1
      %p77 = por %p75, %p76
      %p79 = scmp.ne.s32.totalorder %s62, %s78
      %p80 = scmp.eq.s32.totalorder %s28, 0
      %p81 = por %p79, %p80
      %s82 = ssub.s32 %s22, %s29
      %p83 = scmp.eq.s32.totalorder %s82, 0
      %s85 = sadd.s32 %s84, 1
      %s86 = scalar_select %p83, %s84, %s85
      %p89 = pneg %p83
      %p90 = scmp.eq.s32.totalorder %s22, 1
      %p91 = por %p89, %p90
      %p92 = scmp.ne.s32.totalorder %s84, %s87
      %p93 = scmp.eq.s32.totalorder %s22, 0
      %p94 = por %p92, %p93
      %p95 = scmp.ne.s32.totalorder %s84, %s87
      %p96 = scmp.eq.s32.totalorder %s27, 1
      %p97 = por %p95, %p96
      %p98 = scmp.ne.s32.totalorder %s87, %s88
      %p99 = scmp.eq.s32.totalorder %s27, 0
      %p100 = por %p98, %p99
      %p101 = scmp.ne.s32.totalorder %s87, %s88
      %p102 = scmp.eq.s32.totalorder %s28, 1
      %p103 = por %p101, %p102
      %p105 = scmp.ne.s32.totalorder %s88, %s104
      %p106 = scmp.eq.s32.totalorder %s28, 0
      %p107 = por %p105, %p106
      %s108 = ssub.s32 %s22, %s29
      %p109 = scmp.eq.s32.totalorder %s108, 0
      %s111 = sadd.s32 %s110, 1
      %s112 = scalar_select %p109, %s110, %s111
      %p115 = pneg %p109
      %p116 = scmp.eq.s32.totalorder %s22, 1
      %p117 = por %p115, %p116
      %p118 = scmp.ne.s32.totalorder %s110, %s113
      %p119 = scmp.eq.s32.totalorder %s22, 0
      %p120 = por %p118, %p119
      %p121 = scmp.ne.s32.totalorder %s110, %s113
      %p122 = scmp.eq.s32.totalorder %s27, 1
      %p123 = por %p121, %p122
      %p124 = scmp.ne.s32.totalorder %s113, %s114
      %p125 = scmp.eq.s32.totalorder %s27, 0
      %p126 = por %p124, %p125
      %p127 = scmp.ne.s32.totalorder %s113, %s114
      %p128 = scmp.eq.s32.totalorder %s28, 1
      %p129 = por %p127, %p128
      %p131 = scmp.ne.s32.totalorder %s114, %s130
      %p132 = scmp.eq.s32.totalorder %s28, 0
      %p133 = por %p131, %p132
      %p134 = scmp.le.s32.totalorder 1, %s22
      %p135 = scmp.lt.s32.totalorder %s22, 3
      %p136 = pnand %p134, %p135
      %p137 = pneg %p136
      // Predicated region
      $region9: #{tpu_custom_call.1} parent=5 // pred_check
        _
      $region10: #{tpu_custom_call.1} parent=5 // pred_check_branch
        %139 = sbr.rel (%p136) target = $region12
      $region11: #{tpu_custom_call.1} parent=5 // pred_region
        %s140 = ssub.s32 %s22, 1
      $region12: #{tpu_custom_call.1} parent=5 // pred_fallthru
        _
      %p141 = scmp.lt.s32.totalorder %s22, 2
      // Predicated region
      $region13: #{tpu_custom_call.1} parent=5 // pred_check
        %p142 = pneg %p141
      $region14: #{tpu_custom_call.1} parent=5 // pred_check_branch
        %144 = sbr.rel (%p142) target = $region16
      $region15: #{tpu_custom_call.1} parent=5 // pred_region
        // Predicated region
        $region17: #{tpu_custom_call.1} parent=15 // pred_check
          %p145 = pneg %p42
        $region18: #{tpu_custom_call.1} parent=15 // pred_check_branch
          %147 = sbr.rel (%p145) target = $region20
        $region19: #{tpu_custom_call.1} parent=15 // pred_region
          %s148 = sand.u32 %s32, 1
          %s149 = scalar_lea.sflag [#allocation3], %s148
          %s150 = sand.u32 %s32, 1
          %s151 = smul.addr %s150, 8
          %s152 = scalar_lea.vmem [#allocation2], %s151
          %s154 = ssub.s32 128, 128
          %155 = vsyncadd %s149, %s154
          %s156 = smul.addr %s22, 128
          %s157 = scalar_lea.hbm %s0, %s156
          %s159 = sshll.u32 %s152, 4
          %s160 = int_to_ptr.vmem [resolvable:$true] %s159
          %162 = dma.hbm_to_vmem [thread:$0]  %s157, 128, %s160, %s149
        $region20: #{tpu_custom_call.1} parent=15 // pred_fallthru
          _
        // Predicated region
        $region21: #{tpu_custom_call.1} parent=15 // pred_check
          %p163 = pneg %p68
        $region22: #{tpu_custom_call.1} parent=15 // pred_check_branch
          %165 = sbr.rel (%p163) target = $region24
        $region23: #{tpu_custom_call.1} parent=15 // pred_region
          %s166 = sand.u32 %s58, 1
          %s167 = scalar_lea.sflag [#allocation6], %s166
          %s168 = sand.u32 %s58, 1
          %s169 = smul.addr %s168, 8
          %s170 = scalar_lea.vmem [#allocation5], %s169
          %s172 = ssub.s32 128, 128
          %173 = vsyncadd %s167, %s172
          %s174 = smul.addr %s22, 128
          %s175 = scalar_lea.hbm %s1, %s174
          %s177 = sshll.u32 %s170, 4
          %s178 = int_to_ptr.vmem [resolvable:$true] %s177
          %180 = dma.hbm_to_vmem [thread:$0]  %s175, 128, %s178, %s167
        $region24: #{tpu_custom_call.1} parent=15 // pred_fallthru
          _
      $region16: #{tpu_custom_call.1} parent=5 // pred_fallthru
        _
      %p181 = scmp.le.s32.totalorder 1, %s22
      %p182 = scmp.lt.s32.totalorder %s22, 3
      %p183 = pnand %p181, %p182
      %p184 = pneg %p183
      // Predicated region
      $region25: #{tpu_custom_call.1} parent=5 // pred_check
        _
      $region26: #{tpu_custom_call.1} parent=5 // pred_check_branch
        %186 = sbr.rel (%p183) target = $region28
      $region27: #{tpu_custom_call.1} parent=5 // pred_region
        %s187 = ssub.s32 %s22, 1
        %s188 = sand.u32 %s35, 1
        %s189 = scalar_lea.sflag [#allocation3], %s188
        %s190 = sand.u32 %s35, 1
        %s191 = smul.addr %s190, 8
        %s192 = scalar_lea.vmem [#allocation2], %s191
        // Predicated region
        $region29: #{tpu_custom_call.1} parent=27 // pred_check
          %p193 = pneg %p48
        $region30: #{tpu_custom_call.1} parent=27 // pred_check_branch
          %195 = sbr.rel (%p193) target = $region32
        $region31: #{tpu_custom_call.1} parent=27 // pred_region
          %196 = dma.done %s189, 128
        $region32: #{tpu_custom_call.1} parent=27 // pred_fallthru
          _
        %s197 = sand.u32 %s61, 1
        %s198 = scalar_lea.sflag [#allocation6], %s197
        %s199 = sand.u32 %s61, 1
        %s200 = smul.addr %s199, 8
        %s201 = scalar_lea.vmem [#allocation5], %s200
        // Predicated region
        $region33: #{tpu_custom_call.1} parent=27 // pred_check
          %p202 = pneg %p74
        $region34: #{tpu_custom_call.1} parent=27 // pred_check_branch
          %204 = sbr.rel (%p202) target = $region36
        $region35: #{tpu_custom_call.1} parent=27 // pred_region
          %205 = dma.done %s198, 128
        $region36: #{tpu_custom_call.1} parent=27 // pred_fallthru
          _
        %s206 = sand.u32 %s35, 1
        %s207 = scalar_lea.sflag [#allocation3], %s206
        %s208 = sand.u32 %s35, 1
        %s209 = smul.addr %s208, 8
        %s210 = scalar_lea.vmem [#allocation2], %s209
        %p211 = pneg %p48
        %p212 = pneg %p45
        %s213 = sand.u32 %s61, 1
        %s214 = scalar_lea.sflag [#allocation6], %s213
        %s215 = sand.u32 %s61, 1
        %s216 = smul.addr %s215, 8
        %s217 = scalar_lea.vmem [#allocation5], %s216
        %p218 = pneg %p74
        %p219 = pneg %p71
        %p220 = pneg %p100
        %p221 = pneg %p97
        %s222 = sand.u32 %s87, 1
        %s223 = scalar_lea.sflag [#allocation4], %s222
        %s224 = sand.u32 %s87, 1
        %s225 = smul.addr %s224, 24
        %s226 = scalar_lea.vmem [#allocation7], %s225
        %p227 = pneg %p126
        %p228 = pneg %p123
        %s229 = sand.u32 %s113, 1
        %s230 = scalar_lea.sflag [#allocation9], %s229
        %s231 = sand.u32 %s113, 1
        %s232 = smul.addr %s231, 24
        %s233 = scalar_lea.vmem [#allocation8], %s232
        %v234 = vld [vmem:[%s192] sm:$0xff]
        %v235 = vld [vmem:[%s201] sm:$0xff]
        %v236 = vadd.f32 %v234, %v235
        %v237 = vmul.f32 %v236, %v234
        %238 = vst [vmem:[%s226] sm:$0xff] %v237
        %v239 = vmul.f32 %v236, %v235
        %240 = vst [vmem:[%s233] sm:$0xff] %v239
        %v241 = vmul.f32 %v234, %v234
        %v242 = vmul.f32 %v235, %v235
        %v243 = vadd.f32 %v241, %v242
        %v244 = vmul.f32 %v243, %v234
        %245 = vst [vmem:[%s226 + $0x8] sm:$0xff] %v244
        %v246 = vmul.f32 %v243, %v235
        %247 = vst [vmem:[%s233 + $0x8] sm:$0xff] %v246
        %v248 = vmul.f32 %v241, %v234
        %v249 = vmul.f32 %v242, %v235
        %v250 = vadd.f32 %v248, %v249
        %v251 = vmul.f32 %v250, %v234
        %252 = vst [vmem:[%s226 + $0x10] sm:$0xff] %v251
        %v253 = vmul.f32 %v250, %v235
        %254 = vst [vmem:[%s233 + $0x10] sm:$0xff] %v253
        %s255 = sand.u32 %s87, 1
        %s256 = scalar_lea.sflag [#allocation4], %s255
        %s257 = sand.u32 %s87, 1
        %s258 = smul.addr %s257, 24
        %s259 = scalar_lea.vmem [#allocation7], %s258
        %s260 = sand.u32 %s113, 1
        %s261 = scalar_lea.sflag [#allocation9], %s260
        %s262 = sand.u32 %s113, 1
        %s263 = smul.addr %s262, 24
        %s264 = scalar_lea.vmem [#allocation8], %s263
        // Predicated region
        $region37: #{tpu_custom_call.1} parent=27 // pred_check
          %p265 = pneg %p97
        $region38: #{tpu_custom_call.1} parent=27 // pred_check_branch
          %267 = sbr.rel (%p265) target = $region40
        $region39: #{tpu_custom_call.1} parent=27 // pred_region
          %s269 = ssub.s32 384, 384
          %270 = vsyncadd %s256, %s269
          %s271 = smul.addr %s27, 3
          %s272 = smul.addr %s271, 128
          %s273 = scalar_lea.hbm %s2, %s272
          %s275 = sshll.u32 %s259, 4
          %s276 = int_to_ptr.vmem [resolvable:$true] %s275
          %278 = dma.vmem_to_hbm [thread:$0]  %s276, 384, %s273, %s256
        $region40: #{tpu_custom_call.1} parent=27 // pred_fallthru
          _
        // Predicated region
        $region41: #{tpu_custom_call.1} parent=27 // pred_check
          %p279 = pneg %p123
        $region42: #{tpu_custom_call.1} parent=27 // pred_check_branch
          %281 = sbr.rel (%p279) target = $region44
        $region43: #{tpu_custom_call.1} parent=27 // pred_region
          %s283 = ssub.s32 384, 384
          %284 = vsyncadd %s261, %s283
          %s285 = smul.addr %s27, 3
          %s286 = smul.addr %s285, 128
          %s287 = scalar_lea.hbm %s3, %s286
          %s289 = sshll.u32 %s264, 4
          %s290 = int_to_ptr.vmem [resolvable:$true] %s289
          %292 = dma.vmem_to_hbm [thread:$0]  %s290, 384, %s287, %s261
        $region44: #{tpu_custom_call.1} parent=27 // pred_fallthru
          _
      $region28: #{tpu_custom_call.1} parent=5 // pred_fallthru
        _
      %p293 = scmp.le.s32.totalorder 2, %s22
      // Predicated region
      $region45: #{tpu_custom_call.1} parent=5 // pred_check
        %p294 = pneg %p293
      $region46: #{tpu_custom_call.1} parent=5 // pred_check_branch
        %296 = sbr.rel (%p294) target = $region48
      $region47: #{tpu_custom_call.1} parent=5 // pred_region
        %s297 = ssub.s32 %s22, 2
        // Predicated region
        $region49: #{tpu_custom_call.1} parent=47 // pred_check
          %p298 = pneg %p103
        $region50: #{tpu_custom_call.1} parent=47 // pred_check_branch
          %300 = sbr.rel (%p298) target = $region52
        $region51: #{tpu_custom_call.1} parent=47 // pred_region
          %s301 = sand.u32 %s88, 1
          %s302 = scalar_lea.sflag [#allocation4], %s301
          %s303 = sand.u32 %s88, 1
          %s304 = smul.addr %s303, 24
          %s305 = scalar_lea.vmem [#allocation7], %s304
          %306 = dma.done %s302, 384
        $region52: #{tpu_custom_call.1} parent=47 // pred_fallthru
          _
        // Predicated region
        $region53: #{tpu_custom_call.1} parent=47 // pred_check
          %p307 = pneg %p129
        $region54: #{tpu_custom_call.1} parent=47 // pred_check_branch
          %309 = sbr.rel (%p307) target = $region56
        $region55: #{tpu_custom_call.1} parent=47 // pred_region
          %s310 = sand.u32 %s114, 1
          %s311 = scalar_lea.sflag [#allocation9], %s310
          %s312 = sand.u32 %s114, 1
          %s313 = smul.addr %s312, 24
          %s314 = scalar_lea.vmem [#allocation8], %s313
          %315 = dma.done %s311, 384
        $region56: #{tpu_custom_call.1} parent=47 // pred_fallthru
          _
      $region48: #{tpu_custom_call.1} parent=5 // pred_fallthru
        _
    $region6: #{tpu_custom_call.1} parent=1 // loop_footer
      %s26 = sadd.s32 1, %s22
    $region7: #{tpu_custom_call.1} parent=1 // loop_footer_branch
      %21 = sbr.rel target = $region3
    $region8: #{tpu_custom_call.1} parent=1 // loop_exit
      _
    %316 = vsyncpa [#allocation3], 1
    %s317 = scalar_lea.sflag [#allocation3], 1
    %318 = vsyncpa %s317, 1
    %319 = vsyncpa [#allocation6], 1
    %s320 = scalar_lea.sflag [#allocation6], 1
    %321 = vsyncpa %s320, 1
    %322 = vsyncpa [#allocation4], 1
    %s323 = scalar_lea.sflag [#allocation4], 1
    %324 = vsyncpa %s323, 1
    %325 = vsyncpa [#allocation9], 1
    %s326 = scalar_lea.sflag [#allocation9], 1
    %327 = vsyncpa %s326, 1

</llo_original>
